<compile_context>
chip_gen: v5e
topology: v5e:2x2
jax: 0.10.0
libtpu: 0.0.40
codegen_flags: <defaults>
</compile_context>

<pallas_src>
import jax
import jax.numpy as jnp
import numpy as np
from jax import lax
from jax.experimental import pallas as pl
from jax.experimental.pallas import tpu as pltpu

_VMEM_LIMIT = 48 * 1024 * 1024          # <= v7x's 64 MiB physical per-core VMEM
_ORTHO_RESIDENT_BUDGET = 36 * 1024 * 1024


# ---------------------------------------------------------------------------
# Kernel 1: mean cross-entropy over (N, C) logits, tiled over batch AND class
# dims with an online (flash-style) logsumexp.  Per-batch-tile partial sums
# are emitted and reduced in XLA.
# ---------------------------------------------------------------------------
def _make_ce_kernel(n_rows, n_cols, block_n, block_c, n_j):
    need_row_mask = (n_rows % block_n) != 0
    need_col_mask = (n_cols % block_c) != 0

    def kernel(x_ref, tl_ref, out_ref, m_ref, l_ref):
        i = pl.program_id(0)          # batch-tile index ("parallel")
        j = pl.program_id(1)          # class-tile index ("arbitrary", online LSE)

        @pl.when(j == 0)
        def _():
            m_ref[...] = jnp.full_like(m_ref, -jnp.inf)
            l_ref[...] = jnp.zeros_like(l_ref)

        x = x_ref[...].astype(jnp.float32)                          # (bn, bc)
        if need_col_mask:             # out-of-vocab cols -> exp(-inf) = 0
            col_g = j * block_c + lax.broadcasted_iota(
                jnp.int32, (block_n, block_c), 1)
            x = jnp.where(col_g < n_cols, x, -jnp.inf)

        m_new = jnp.maximum(m_ref[...], jnp.max(x, axis=-1, keepdims=True))
        alpha = jnp.exp(m_ref[...] - m_new)
        l_ref[...] = alpha * l_ref[...] + jnp.sum(
            jnp.exp(x - m_new), axis=-1, keepdims=True)
        m_ref[...] = m_new

        @pl.when(j == n_j - 1)
        def _():
            # ce = logsumexp - target_logit (target logit gathered outside).
            ce_rows = m_ref[...] + jnp.log(l_ref[...]) - tl_ref[...]  # (bn, 1)
            if need_row_mask:
                row_g = i * block_n + lax.broadcasted_iota(
                    jnp.int32, (block_n, 1), 0)
                ce_rows = jnp.where(row_g < n_rows, ce_rows, 0.0)
            out_ref[...] = jnp.sum(ce_rows, keepdims=True)            # (1, 1)

    return kernel


def cross_entropy_mean_pallas(logits, targets, *, block_n=512, block_c=2048):
    """mean F.cross_entropy(logits, targets)  (weight=None, no ignore_index)."""
    n, c = logits.shape
    block_n = n if n <= block_n else block_n
    block_c = c if c <= block_c else block_c
    if n > block_n:
        assert block_n % 8 == 0
    if c > block_c:
        assert block_c % 128 == 0
    n_i = pl.cdiv(n, block_n)
    n_j = pl.cdiv(c, block_c)
    itemsize = jnp.dtype(logits.dtype).itemsize

    # Target logit gathered once in XLA -> (N, 1) f32 side input; removes a
    # full-tile select + a third cross-lane reduction from every kernel step.
    tgt_idx = targets.astype(jnp.int32).reshape(n, 1)
    tl = jnp.take_along_axis(logits, tgt_idx, axis=1).astype(jnp.float32)

    partials = pl.pallas_call(
        _make_ce_kernel(n, c, block_n, block_c, n_j),
        out_shape=jax.ShapeDtypeStruct((n_i, 1), jnp.float32),
        grid_spec=pltpu.PrefetchScalarGridSpec(
            num_scalar_prefetch=0,
            grid=(n_i, n_j),
            in_specs=[
                pl.BlockSpec((block_n, block_c), lambda i, j: (i, j)),
                pl.BlockSpec((block_n, 1), lambda i, j: (i, 0)),
            ],
            out_specs=pl.BlockSpec((1, 1), lambda i, j: (i, 0)),
            scratch_shapes=[
                pltpu.VMEM((block_n, 1), jnp.float32),  # running row max
                pltpu.VMEM((block_n, 1), jnp.float32),  # running row sum-exp
            ],
        ),
        compiler_params=pltpu.CompilerParams(
            # Batch tiles are independent (megacore on v7x); class axis is the
            # online-logsumexp reduction and stays sequential / last.
            dimension_semantics=("parallel", "arbitrary"),
            vmem_limit_bytes=_VMEM_LIMIT,
        ),
        cost_estimate=pl.CostEstimate(
            flops=int(5 * n * c),
            transcendentals=int(n * c + n),
            bytes_accessed=int(n * c * itemsize + 2 * n * 4 + n_i * 4),
        ),
    )(logits, tl)
    return jnp.sum(partials) / n


# ---------------------------------------------------------------------------
# Kernel 2: orthogonality penalty for one flattened weight W (O, F):
#   M = W W^T ; penalty = sum_i sqrt( sum_j (M[i,j] - I[i,j] + 1e-6)^2 )
# Grid = (O row tiles, M column tiles, fan-in reduction tiles).
#   acc (TM, TN) f32 holds the current M tile (initialized to eps - I_tile),
#   ssq (TM, 1)  f32 accumulates row sums-of-squares across column tiles,
#   sqrt + per-row-norm output at the last (j, k); summed outside in XLA.
# When W fits VMEM, TN = O and TK = F -> RHS block index is constant and W is
# DMAed exactly once (resident RHS).
# ---------------------------------------------------------------------------
def _make_ortho_kernel(o, f, tm, tn, tk, n_j, n_k, eps=1e-6):
    need_k_mask = (f % tk) != 0
    need_n_mask = (o % tn) != 0

    def kernel(wl_ref, wr_ref, out_ref, acc_ref, ssq_ref):
        i = pl.program_id(0)          # row tile of W / M       ("parallel")
        j = pl.program_id(1)          # column tile of M        ("arbitrary")
        k = pl.program_id(2)          # fan-in reduction tile   ("arbitrary", last)

        @pl.when((j == 0) & (k == 0))
        def _():
            ssq_ref[...] = jnp.zeros_like(ssq_ref)

        @pl.when(k == 0)
        def _():
            # Fold identity + pairwise_distance eps into the init so the
            # finalize is just square/sum (overlaps the first RHS DMA instead
            # of sitting in the MXU-drain epilogue).
            row_g = i * tm + lax.broadcasted_iota(jnp.int32, (tm, tn), 0)
            col_g = j * tn + lax.broadcasted_iota(jnp.int32, (tm, tn), 1)
            acc_ref[...] = eps - (row_g == col_g).astype(jnp.float32)

        a = wl_ref[...]               # (tm, tk) native dtype (bf16 stays bf16)
        b = wr_ref[...]               # (tn, tk) native dtype
        if need_k_mask:               # zero out-of-range fan-in cols (last tile)
            kvalid = (k * tk + lax.broadcasted_iota(jnp.int32, (1, tk), 1)) < f
            a = jnp.where(kvalid, a, jnp.zeros((), a.dtype))
            b = jnp.where(kvalid, b, jnp.zeros((), b.dtype))

        # M_tile += A @ B^T: contract the trailing fan-in dim of both operands
        # (flash-attention q @ k^T form); MXU with f32 accumulation.
        acc_ref[...] += lax.dot_general(
            a, b, (((1,), (1,)), ((), ())),
            preferred_element_type=jnp.float32)

        @pl.when(k == n_k - 1)
        def _():
            d = acc_ref[...]                                       # (tm, tn) f32
            if need_n_mask:           # drop padded M columns of the last j tile
                col_g = j * tn + lax.broadcasted_iota(jnp.int32, (tm, tn), 1)
                d = jnp.where(col_g < o, d, 0.0)
            ssq_ref[...] = ssq_ref[...] + jnp.sum(d * d, axis=-1, keepdims=True)

        @pl.when((j == n_j - 1) & (k == n_k - 1))
        def _():
            out_ref[...] = jnp.sqrt(ssq_ref[...])                  # (tm, 1)

    return kernel


def ortho_fnorm_pallas(w2d, *, tm=None, tn=None, tk=None):
    """sum_i || (W W^T - I)[i, :] + 1e-6 ||_2 for a flattened weight W (O, F)."""
    # TODO(synk): optional bf16 cast of f32 weights for ~3x MXU throughput on
    # this regularizer term (keep f32 accumulation); left off to match the f32
    # reference exactly.
    o, f = w2d.shape
    itemsize = jnp.dtype(w2d.dtype).itemsize

    if tm is None:
        tm = o if o <= 256 else 256
    # Resident RHS (W DMAed exactly once) when 2x RHS + 2x LHS tile + acc fit
    # the VMEM budget; otherwise bound VMEM with column/fan-in tiles (RHS then
    # re-streamed once per row tile).
    resident = ((2 * o * f + 2 * tm * f) * itemsize + tm * o * 4
                <= _ORTHO_RESIDENT_BUDGET)
    if tn is None:
        tn = o if (resident or o <= 2048) else 2048
    if tk is None:
        tk = f if (resident or f <= 1024) else 1024

    if o > tm:
        assert tm % 8 == 0
    if o > tn:
        assert tn % 8 == 0
    if f > tk:
        assert tk % 128 == 0

    n_i = pl.cdiv(o, tm)
    n_j = pl.cdiv(o, tn)
    n_k = pl.cdiv(f, tk)
    rhs_streams = 1 if (n_j == 1 and n_k == 1) else n_i

    row_norms = pl.pallas_call(
        _make_ortho_kernel(o, f, tm, tn, tk, n_j, n_k),
        out_shape=jax.ShapeDtypeStruct((o, 1), jnp.float32),
        grid_spec=pltpu.PrefetchScalarGridSpec(
            num_scalar_prefetch=0,
            grid=(n_i, n_j, n_k),
            in_specs=[
                pl.BlockSpec((tm, tk), lambda i, j, k: (i, k)),   # LHS row tile
                pl.BlockSpec((tn, tk), lambda i, j, k: (j, k)),   # RHS col tile
            ],
            out_specs=pl.BlockSpec((tm, 1), lambda i, j, k: (i, 0)),
            scratch_shapes=[
                pltpu.VMEM((tm, tn), jnp.float32),   # current M tile
                pltpu.VMEM((tm, 1), jnp.float32),    # running row sum-of-squares
            ],
        ),
        compiler_params=pltpu.CompilerParams(
            # Row tiles independent (megacore on v7x); column + fan-in are the
            # reductions and stay sequential, fan-in last.
            dimension_semantics=("parallel", "arbitrary", "arbitrary"),
            vmem_limit_bytes=_VMEM_LIMIT,
        ),
        cost_estimate=pl.CostEstimate(
            flops=int(2 * o * o * f + 3 * o * o),
            transcendentals=0,
            bytes_accessed=int((1 + rhs_streams) * o * f * itemsize + o * 4),
        ),
    )(w2d, w2d)
    return jnp.sum(row_norms)


def _ortho_fnorm_xla(w2d):
    """Tiny-weight fallback: plain XLA so it fuses (no pallas_call launch)."""
    w = w2d.astype(jnp.float32)
    m = w @ w.T
    d = m - jnp.eye(m.shape[0], dtype=jnp.float32) + 1e-6
    return jnp.sum(jnp.sqrt(jnp.sum(d * d, axis=-1)))


# ---------------------------------------------------------------------------
# Wrapper = CrossEntropyLossWithOrtho.forward (weight=None, method='FNorm')
# ---------------------------------------------------------------------------
_SMALL_WEIGHT_ELEMS = 128 * 128   # below ~one MXU tile: not worth a kernel launch


def cross_entropy_loss_with_ortho(logits, targets, model_weights, lemda):
    """model_weights: list of Conv2d (O,I,kH,kW) / Linear (O,I) weight arrays."""
    # TODO(synk): method='SRIP' (power iteration with torch.randn noise) and the
    # class-`weight` / ignore_index options of F.cross_entropy are not
    # implemented; module defaults (weight=None, method='FNorm') are reproduced.
    # TODO(synk): fold all large layers into ONE pallas_call (concatenated
    # weight buffer + PrefetchScalarGridSpec offset tables) to amortize launches.
    penalty = jnp.float32(0.0)
    for w in model_weights:
        w2d = w.reshape(w.shape[0], -1)                  # (out_features, fan_in)
        if w2d.size <= _SMALL_WEIGHT_ELEMS:
            penalty = penalty + _ortho_fnorm_xla(w2d)
        else:
            penalty = penalty + ortho_fnorm_pallas(w2d)
    ce = cross_entropy_mean_pallas(logits, targets)
    return ce + lemda / 2.0 * penalty


# ---------------------------------------------------------------------------
# Pure-JAX reference (numerical sanity check).
# ---------------------------------------------------------------------------
def _reference(logits, targets, model_weights, lemda):
    logp = jax.nn.log_softmax(logits.astype(jnp.float32), axis=-1)
    ce = -jnp.mean(logp[jnp.arange(logits.shape[0]), targets])
    pen = 0.0
    for w in model_weights:
        w2d = w.reshape(w.shape[0], -1).astype(jnp.float32)
        m = w2d @ w2d.T
        d = m - jnp.eye(m.shape[0], dtype=jnp.float32) + 1e-6
        pen = pen + jnp.sum(jnp.sqrt(jnp.sum(d * d, axis=-1)))
    return ce + lemda / 2.0 * pen


if __name__ == "__main__":
    key = jax.random.PRNGKey(0)
    k1, k2, k3, k4, k5, k6 = jax.random.split(key, 6)

    # Synthetic "model": Conv2d(4 -> 8, k=3) takes the fused-XLA path (tiny),
    # Linear(256 -> 128) exercises the resident-RHS Pallas ortho kernel.
    conv_w = jax.random.normal(k1, (8, 4, 3, 3), jnp.float32) * 0.1
    lin_w = jax.random.normal(k2, (128, 256), jnp.float32) * 0.05
    model_weights = [conv_w, lin_w]

    # Classification head output: batch=8, classes=12.
    logits = jax.random.normal(k3, (8, 12), jnp.float32)
    targets = jax.random.randint(k4, (8,), 0, 12, dtype=jnp.int32)
    lemda = 0.01

    loss = jax.block_until_ready(
        cross_entropy_loss_with_ortho(logits, targets, model_weights, lemda))
    ref = jax.block_until_ready(
        _reference(logits, targets, model_weights, lemda))
    assert np.allclose(np.asarray(loss), np.asarray(ref),
                       rtol=1e-3, atol=1e-3), (loss, ref)

    # Extra checks that exercise the multi-tile + boundary-masking paths of
    # both kernels with deliberately small tiles (remainders on every axis).
    big_logits = jax.random.normal(k5, (20, 320), jnp.float32)
    big_targets = jax.random.randint(k6, (20,), 0, 320, dtype=jnp.int32)
    ce_tiled = jax.block_until_ready(
        cross_entropy_mean_pallas(big_logits, big_targets,
                                  block_n=8, block_c=128))
    logp = jax.nn.log_softmax(big_logits, axis=-1)
    ce_ref = -jnp.mean(logp[jnp.arange(big_logits.shape[0]), big_targets])
    assert np.allclose(np.asarray(ce_tiled), np.asarray(ce_ref),
                       rtol=1e-3, atol=1e-3), (ce_tiled, ce_ref)

    # Column-tiled ortho path: partial row tiles (88 % 16), partial column
    # tiles (88 % 32) and partial fan-in tiles (336 % 128) all exercised.
    w_odd = jax.random.normal(k1, (88, 336), jnp.float32) * 0.05
    pen_tiled = jax.block_until_ready(
        ortho_fnorm_pallas(w_odd, tm=16, tn=32, tk=128))
    mm = w_odd @ w_odd.T
    dd = mm - jnp.eye(88, dtype=jnp.float32) + 1e-6
    pen_ref = jnp.sum(jnp.sqrt(jnp.sum(dd * dd, axis=-1)))
    assert np.allclose(np.asarray(pen_tiled), np.asarray(pen_ref),
                       rtol=1e-3, atol=1e-3), (pen_tiled, pen_ref)

    print("KERNEL_OK")
</pallas_src>

<mosaic_0001>
module attributes {stable_mosaic.version = 11 : i64} {
  func.func @kernel(%arg0: i32, %arg1: i32, %arg2: i32, %arg3: memref<128x256xf32, #tpu.memory_space<vmem>>, %arg4: memref<128x256xf32, #tpu.memory_space<vmem>>, %arg5: memref<128x1xf32, #tpu.memory_space<vmem>>, %arg6: memref<128x128xf32, #tpu.memory_space<vmem>>, %arg7: memref<128x1xf32, #tpu.memory_space<vmem>>) attributes {dimension_semantics = [#tpu.dimension_semantics<parallel>, #tpu.dimension_semantics<arbitrary>, #tpu.dimension_semantics<arbitrary>], iteration_bounds = array<i64: 1, 1, 1>, scalar_prefetch = 0 : i64, scratch_operands = 2 : i64, tpu.core_type = #tpu.core_type<tc>, window_params = [{transform_indices = @transform_0, window_bounds = array<i64: 128, 256>}, {transform_indices = @transform_1, window_bounds = array<i64: 128, 256>}, {transform_indices = @transform_2, window_bounds = array<i64: 128, 1>}]} {
    %c0_i32 = arith.constant 0 : i32
    %0 = arith.cmpi eq, %arg1, %c0_i32 : i32
    %c0_i32_0 = arith.constant 0 : i32
    %1 = arith.cmpi eq, %arg2, %c0_i32_0 : i32
    %2 = arith.andi %0, %1 : i1
    %3 = arith.extui %2 : i1 to i32
    %c0_i32_1 = arith.constant 0 : i32
    %4 = arith.cmpi ne, %3, %c0_i32_1 : i32
    scf.if %4 {
      %cst_16 = arith.constant 0.000000e+00 : f32
      %22 = vector.broadcast %cst_16 : f32 to vector<128x1xf32>
      %c0_17 = arith.constant 0 : index
      %c0_18 = arith.constant 0 : index
      %23 = vector.load %arg7[%c0_17, %c0_18] : memref<128x1xf32, #tpu.memory_space<vmem>>, vector<128x1xf32>
      tpu.vector_store %arg7[%c0_17, %c0_18], %22 {strides = array<i32>} : memref<128x1xf32, #tpu.memory_space<vmem>>, vector<128x1xf32>,
    } else {
    }
    %c0_i32_2 = arith.constant 0 : i32
    %5 = arith.cmpi eq, %arg2, %c0_i32_2 : i32
    %6 = arith.extui %5 : i1 to i32
    %c0_i32_3 = arith.constant 0 : i32
    %7 = arith.cmpi ne, %6, %c0_i32_3 : i32
    scf.if %7 {
      %c128_i32 = arith.constant 128 : i32
      %22 = arith.muli %arg0, %c128_i32 : i32
      %23 = tpu.iota {dimensions = array<i32: 0>} : vector<128x128xi32>
      %24 = vector.broadcast %22 : i32 to vector<128x128xi32>
      %25 = arith.addi %24, %23 : vector<128x128xi32>
      %c128_i32_16 = arith.constant 128 : i32
      %26 = arith.muli %arg1, %c128_i32_16 : i32
      %27 = tpu.iota {dimensions = array<i32: 1>} : vector<128x128xi32>
      %28 = vector.broadcast %26 : i32 to vector<128x128xi32>
      %29 = arith.addi %28, %27 : vector<128x128xi32>
      %30 = arith.cmpi eq, %25, %29 : vector<128x128xi32>
      %31 = arith.extui %30 : vector<128x128xi1> to vector<128x128xi32>
      %32 = arith.sitofp %31 : vector<128x128xi32> to vector<128x128xf32>
      %cst_17 = arith.constant 9.99999997E-7 : f32
      %33 = vector.broadcast %cst_17 : f32 to vector<128x128xf32>
      %34 = arith.subf %33, %32 : vector<128x128xf32>
      %c0_18 = arith.constant 0 : index
      %c0_19 = arith.constant 0 : index
      %35 = vector.load %arg6[%c0_18, %c0_19] : memref<128x128xf32, #tpu.memory_space<vmem>>, vector<128x128xf32>
      tpu.vector_store %arg6[%c0_18, %c0_19], %34 {strides = array<i32>} : memref<128x128xf32, #tpu.memory_space<vmem>>, vector<128x128xf32>,
    } else {
    }
    %c0 = arith.constant 0 : index
    %c0_4 = arith.constant 0 : index
    %8 = vector.load %arg3[%c0, %c0_4] : memref<128x256xf32, #tpu.memory_space<vmem>>, vector<128x256xf32>
    %c0_5 = arith.constant 0 : index
    %c0_6 = arith.constant 0 : index
    %9 = vector.load %arg4[%c0_5, %c0_6] : memref<128x256xf32, #tpu.memory_space<vmem>>, vector<128x256xf32>
    %c0_7 = arith.constant 0 : index
    %c0_8 = arith.constant 0 : index
    %10 = vector.load %arg6[%c0_7, %c0_8] : memref<128x128xf32, #tpu.memory_space<vmem>>, vector<128x128xf32>
    %cst = arith.constant dense<0.000000e+00> : vector<128x128xf32>
    %11 = tpu.matmul %8, %9, %cst {dimension_numbers = #tpu.dot_dimension_numbers<[1], [1], [0], [0], [0, 0, 1, 0], [], []>} : vector<128x256xf32>, vector<128x256xf32>, vector<128x128xf32> -> vector<128x128xf32>
    %12 = arith.addf %10, %11 : vector<128x128xf32>
    %c0_9 = arith.constant 0 : index
    %c0_10 = arith.constant 0 : index
    %13 = vector.load %arg6[%c0_9, %c0_10] : memref<128x128xf32, #tpu.memory_space<vmem>>, vector<128x128xf32>
    tpu.vector_store %arg6[%c0_9, %c0_10], %12 {strides = array<i32>} : memref<128x128xf32, #tpu.memory_space<vmem>>, vector<128x128xf32>,
    %c0_i32_11 = arith.constant 0 : i32
    %14 = arith.cmpi eq, %arg2, %c0_i32_11 : i32
    %15 = arith.extui %14 : i1 to i32
    %c0_i32_12 = arith.constant 0 : i32
    %16 = arith.cmpi ne, %15, %c0_i32_12 : i32
    scf.if %16 {
      %c0_16 = arith.constant 0 : index
      %c0_17 = arith.constant 0 : index
      %22 = vector.load %arg6[%c0_16, %c0_17] : memref<128x128xf32, #tpu.memory_space<vmem>>, vector<128x128xf32>
      %c0_18 = arith.constant 0 : index
      %c0_19 = arith.constant 0 : index
      %23 = vector.load %arg7[%c0_18, %c0_19] : memref<128x1xf32, #tpu.memory_space<vmem>>, vector<128x1xf32>
      %24 = arith.mulf %22, %22 : vector<128x128xf32>
      %cst_20 = arith.constant dense<0.000000e+00> : vector<128xf32>
      %25 = vector.multi_reduction <add>, %24, %cst_20 [1] : vector<128x128xf32> to vector<128xf32>
      %26 = vector.shape_cast %25 : vector<128xf32> to vector<128x1xf32>
      %27 = arith.addf %23, %26 : vector<128x1xf32>
      %c0_21 = arith.constant 0 : index
      %c0_22 = arith.constant 0 : index
      %28 = vector.load %arg7[%c0_21, %c0_22] : memref<128x1xf32, #tpu.memory_space<vmem>>, vector<128x1xf32>
      tpu.vector_store %arg7[%c0_21, %c0_22], %27 {strides = array<i32>} : memref<128x1xf32, #tpu.memory_space<vmem>>, vector<128x1xf32>,
    } else {
    }
    %c0_i32_13 = arith.constant 0 : i32
    %17 = arith.cmpi eq, %arg1, %c0_i32_13 : i32
    %c0_i32_14 = arith.constant 0 : i32
    %18 = arith.cmpi eq, %arg2, %c0_i32_14 : i32
    %19 = arith.andi %17, %18 : i1
    %20 = arith.extui %19 : i1 to i32
    %c0_i32_15 = arith.constant 0 : i32
    %21 = arith.cmpi ne, %20, %c0_i32_15 : i32
    scf.if %21 {
      %c0_16 = arith.constant 0 : index
      %c0_17 = arith.constant 0 : index
      %22 = vector.load %arg7[%c0_16, %c0_17] : memref<128x1xf32, #tpu.memory_space<vmem>>, vector<128x1xf32>
      %23 = math.sqrt %22 : vector<128x1xf32>
      %c0_18 = arith.constant 0 : index
      %c0_19 = arith.constant 0 : index
      %24 = vector.load %arg5[%c0_18, %c0_19] : memref<128x1xf32, #tpu.memory_space<vmem>>, vector<128x1xf32>
      tpu.vector_store %arg5[%c0_18, %c0_19], %23 {strides = array<i32>} : memref<128x1xf32, #tpu.memory_space<vmem>>, vector<128x1xf32>,
    } else {
    }
    return
  }
  func.func @transform_0(%arg0: i32, %arg1: i32, %arg2: i32) -> (i32, i32) {
    %c0_i32 = arith.constant 0 : i32
    return %arg0, %arg2 : i32, i32
  }
  func.func @transform_1(%arg0: i32, %arg1: i32, %arg2: i32) -> (i32, i32) {
    %c0_i32 = arith.constant 0 : i32
    return %arg1, %arg2 : i32, i32
  }
  func.func @transform_2(%arg0: i32, %arg1: i32, %arg2: i32) -> (i32, i32) {
    %c0_i32 = arith.constant 0 : i32
    %c0_i32_0 = arith.constant 0 : i32
    return %arg0, %c0_i32 : i32, i32
  }
}

</mosaic_0001>

<llo_original>
// kernel: tpu_custom_call.1
$region0: #{tpu_custom_call.1}
  #allocation0 [shape = 'u32[]', space=smem, size = 0x4, offset = 0x4, fixed_abs, tag = 'smem constant byte address 0x4 - core index']
  #allocation1 [shape = 'u32[72,128]{1,0:T(1,128)}', space=vmem, size = 0x9000, scoped, tag = 'internal scratch']
  #allocation2 [shape = 'f32[128,128]{1,0:T(8,128)}', space=vmem, size = 0x10000, scoped, tag = 'scratch operand']
  #allocation3 [shape = 'f32[128,1]{1,0:T(8,128)}', space=vmem, size = 0x10000, scoped, tag = 'scratch operand']
  %s0 = inlined_call_operand.hbm [shape: f32[128,256], index: 0, kind: input, shape index: {}]
  %s1 = inlined_call_operand.hbm [shape: f32[128,256], index: 1, kind: input, shape index: {}]
  %s2 = inlined_call_operand.vmem [shape: f32[128,1], index: 2, kind: output, shape index: {}]
  %s3 = sld [smem:[#allocation0]]
  $region42: #{tpu_custom_call.1} parent=0
    _
  %s5 = ssub.s32 1, %s3
  %s6 = scalar_select 0, %s5, %s3
  $region1: #{tpu_custom_call.1} parent=0
    #allocation4 [shape = 'u8[131072]{0}', space=vmem, size = 0x20000, scoped, tag = 'input window, operand 0, single buffered']
    #allocation5 [shape = 's32[1]{0}', space=sflag, size = 0x4, scoped, tag = 'scoped memory for tpu_custom_call.1']
    #allocation6 [shape = 'u8[131072]{0}', space=vmem, size = 0x20000, scoped, tag = 'input window, operand 1, single buffered']
    #allocation7 [shape = 's32[1]{0}', space=sflag, size = 0x4, scoped, tag = 'scoped memory for tpu_custom_call.1']
    %7 = vsyncpa [#allocation5], 0
    %8 = vsyncpa [#allocation7], 0
    // Predicated region
    $region2: #{tpu_custom_call.1} parent=1 // pred_check
      _
    $region3: #{tpu_custom_call.1} parent=1 // pred_check_branch
      %10 = sbr.rel (0) target = $region5
    $region4: #{tpu_custom_call.1} parent=1 // pred_region
      %12 = vsyncadd [#allocation5], 0
      %s13 = sshll.u32 %s0, 4
      %s14 = int_to_ptr.hbm [resolvable:$true] %s13
      %s15 = sshll.u32 [#allocation4], 4
      %s16 = int_to_ptr.vmem [resolvable:$true] %s15
      %21 = dma.hbm_to_vmem [thread:$0]  %s14, 4096, %s16, [#allocation5], 256, 256, 16
    $region5: #{tpu_custom_call.1} parent=1 // pred_fallthru
      _
    // Predicated region
    $region6: #{tpu_custom_call.1} parent=1 // pred_check
      _
    $region7: #{tpu_custom_call.1} parent=1 // pred_check_branch
      %23 = sbr.rel (0) target = $region9
    $region8: #{tpu_custom_call.1} parent=1 // pred_region
      %25 = vsyncadd [#allocation7], 0
      %s26 = sshll.u32 %s1, 4
      %s27 = int_to_ptr.hbm [resolvable:$true] %s26
      %s28 = sshll.u32 [#allocation6], 4
      %s29 = int_to_ptr.vmem [resolvable:$true] %s28
      %34 = dma.hbm_to_vmem [thread:$0]  %s27, 4096, %s29, [#allocation7], 256, 256, 16
    $region9: #{tpu_custom_call.1} parent=1 // pred_fallthru
      _
    // Predicated region
    $region10: #{tpu_custom_call.1} parent=1 // pred_check
      _
    $region11: #{tpu_custom_call.1} parent=1 // pred_check_branch
      %36 = sbr.rel (0) target = $region13
    $region12: #{tpu_custom_call.1} parent=1 // pred_region
      %38 = dma.done [#allocation5], 4096
    $region13: #{tpu_custom_call.1} parent=1 // pred_fallthru
      _
    // Predicated region
    $region14: #{tpu_custom_call.1} parent=1 // pred_check
      _
    $region15: #{tpu_custom_call.1} parent=1 // pred_check_branch
      %40 = sbr.rel (0) target = $region17
    $region16: #{tpu_custom_call.1} parent=1 // pred_region
      %42 = dma.done [#allocation7], 4096
    $region17: #{tpu_custom_call.1} parent=1 // pred_fallthru
      _
    %p43 = scmp.eq.s32.totalorder 0, 0
    %p44 = scmp.eq.s32.totalorder 0, 0
    %p45 = pnand %p43, %p44
    %p46 = pneg %p45
    // Predicated region
    $region18: #{tpu_custom_call.1} parent=1 // pred_check
      _
    $region19: #{tpu_custom_call.1} parent=1 // pred_check_branch
      %48 = sbr.rel (%p45) target = $region21
    $region20: #{tpu_custom_call.1} parent=1 // pred_region
      %vm49 = vcmask 7168
      %50 = vst.msk [vmem:[#allocation3] sm:$0xff] %vm49, 0.0
      %51 = vst.msk [vmem:[#allocation3 + $0x8] sm:$0xff] %vm49, 0.0
      %52 = vst.msk [vmem:[#allocation3 + $0x10] sm:$0xff] %vm49, 0.0
      %53 = vst.msk [vmem:[#allocation3 + $0x18] sm:$0xff] %vm49, 0.0
      %54 = vst.msk [vmem:[#allocation3 + $0x20] sm:$0xff] %vm49, 0.0
      %55 = vst.msk [vmem:[#allocation3 + $0x28] sm:$0xff] %vm49, 0.0
      %56 = vst.msk [vmem:[#allocation3 + $0x30] sm:$0xff] %vm49, 0.0
      %57 = vst.msk [vmem:[#allocation3 + $0x38] sm:$0xff] %vm49, 0.0
      %58 = vst.msk [vmem:[#allocation3 + $0x40] sm:$0xff] %vm49, 0.0
      %59 = vst.msk [vmem:[#allocation3 + $0x48] sm:$0xff] %vm49, 0.0
      %60 = vst.msk [vmem:[#allocation3 + $0x50] sm:$0xff] %vm49, 0.0
      %61 = vst.msk [vmem:[#allocation3 + $0x58] sm:$0xff] %vm49, 0.0
      %62 = vst.msk [vmem:[#allocation3 + $0x60] sm:$0xff] %vm49, 0.0
      %63 = vst.msk [vmem:[#allocation3 + $0x68] sm:$0xff] %vm49, 0.0
      %64 = vst.msk [vmem:[#allocation3 + $0x70] sm:$0xff] %vm49, 0.0
      %65 = vst.msk [vmem:[#allocation3 + $0x78] sm:$0xff] %vm49, 0.0
    $region21: #{tpu_custom_call.1} parent=1 // pred_fallthru
      _
    // Predicated region
    $region22: #{tpu_custom_call.1} parent=1 // pred_check
      %p66 = pneg %p44
    $region23: #{tpu_custom_call.1} parent=1 // pred_check_branch
      %68 = sbr.rel (%p66) target = $region25
    $region24: #{tpu_custom_call.1} parent=1 // pred_region
      %s69 = smul.u32 0, 128
      %v70 = vlaneseq
      %v71 = vshrl.u32 %v70, 7
      %v72 = vadd.s32 %v71, 8
      %v73 = vadd.s32 %v71, 16
      %v74 = vadd.s32 %v71, 24
      %v75 = vadd.s32 %v71, 32
      %v76 = vadd.s32 %v71, 40
      %v77 = vadd.s32 %v71, 48
      %v78 = vadd.s32 %v71, 56
      %v79 = vadd.s32 %v71, 64
      %v80 = vadd.s32 %v71, 72
      %v81 = vadd.s32 %v71, 80
      %v82 = vadd.s32 %v71, 88
      %v83 = vadd.s32 %v71, 96
      %v84 = vadd.s32 %v71, 104
      %v85 = vadd.s32 %v71, 112
      %v86 = vadd.s32 %v71, 120
      %v87 = vstv %s69
      %v88 = vadd.s32 %v87, %v71
      %v89 = vadd.s32 %v87, %v72
      %v90 = vadd.s32 %v87, %v73
      %v91 = vadd.s32 %v87, %v74
      %v92 = vadd.s32 %v87, %v75
      %v93 = vadd.s32 %v87, %v76
      %v94 = vadd.s32 %v87, %v77
      %v95 = vadd.s32 %v87, %v78
      %v96 = vadd.s32 %v87, %v79
      %v97 = vadd.s32 %v87, %v80
      %v98 = vadd.s32 %v87, %v81
      %v99 = vadd.s32 %v87, %v82
      %v100 = vadd.s32 %v87, %v83
      %v101 = vadd.s32 %v87, %v84
      %v102 = vadd.s32 %v87, %v85
      %v103 = vadd.s32 %v87, %v86
      %s104 = smul.u32 0, 128
      %v105 = vlaneseq
      %v106 = vand.u32 %v105, 127
      %v107 = vstv %s104
      %v108 = vadd.s32 %v107, %v106
      %vm109 = vcmp.eq.s32.totalorder %v88, %v108
      %vm110 = vcmp.eq.s32.totalorder %v89, %v108
      %vm111 = vcmp.eq.s32.totalorder %v90, %v108
      %vm112 = vcmp.eq.s32.totalorder %v91, %v108
      %vm113 = vcmp.eq.s32.totalorder %v92, %v108
      %vm114 = vcmp.eq.s32.totalorder %v93, %v108
      %vm115 = vcmp.eq.s32.totalorder %v94, %v108
      %vm116 = vcmp.eq.s32.totalorder %v95, %v108
      %vm117 = vcmp.eq.s32.totalorder %v96, %v108
      %vm118 = vcmp.eq.s32.totalorder %v97, %v108
      %vm119 = vcmp.eq.s32.totalorder %v98, %v108
      %vm120 = vcmp.eq.s32.totalorder %v99, %v108
      %vm121 = vcmp.eq.s32.totalorder %v100, %v108
      %vm122 = vcmp.eq.s32.totalorder %v101, %v108
      %vm123 = vcmp.eq.s32.totalorder %v102, %v108
      %vm124 = vcmp.eq.s32.totalorder %v103, %v108
      %v125 = vsel %vm109, 1, 0
      %v126 = vsel %vm110, 1, 0
      %v127 = vsel %vm111, 1, 0
      %v128 = vsel %vm112, 1, 0
      %v129 = vsel %vm113, 1, 0
      %v130 = vsel %vm114, 1, 0
      %v131 = vsel %vm115, 1, 0
      %v132 = vsel %vm116, 1, 0
      %v133 = vsel %vm117, 1, 0
      %v134 = vsel %vm118, 1, 0
      %v135 = vsel %vm119, 1, 0
      %v136 = vsel %vm120, 1, 0
      %v137 = vsel %vm121, 1, 0
      %v138 = vsel %vm122, 1, 0
      %v139 = vsel %vm123, 1, 0
      %v140 = vsel %vm124, 1, 0
      %v141 = vcvt.s32.f32 %v125
      %v142 = vcvt.s32.f32 %v126
      %v143 = vcvt.s32.f32 %v127
      %v144 = vcvt.s32.f32 %v128
      %v145 = vcvt.s32.f32 %v129
      %v146 = vcvt.s32.f32 %v130
      %v147 = vcvt.s32.f32 %v131
      %v148 = vcvt.s32.f32 %v132
      %v149 = vcvt.s32.f32 %v133
      %v150 = vcvt.s32.f32 %v134
      %v151 = vcvt.s32.f32 %v135
      %v152 = vcvt.s32.f32 %v136
      %v153 = vcvt.s32.f32 %v137
      %v154 = vcvt.s32.f32 %v138
      %v155 = vcvt.s32.f32 %v139
      %v156 = vcvt.s32.f32 %v140
      %v157 = vsub.f32 1e-06, %v141
      %v158 = vsub.f32 1e-06, %v142
      %v159 = vsub.f32 1e-06, %v143
      %v160 = vsub.f32 1e-06, %v144
      %v161 = vsub.f32 1e-06, %v145
      %v162 = vsub.f32 1e-06, %v146
      %v163 = vsub.f32 1e-06, %v147
      %v164 = vsub.f32 1e-06, %v148
      %v165 = vsub.f32 1e-06, %v149
      %v166 = vsub.f32 1e-06, %v150
      %v167 = vsub.f32 1e-06, %v151
      %v168 = vsub.f32 1e-06, %v152
      %v169 = vsub.f32 1e-06, %v153
      %v170 = vsub.f32 1e-06, %v154
      %v171 = vsub.f32 1e-06, %v155
      %v172 = vsub.f32 1e-06, %v156
      %173 = vst [vmem:[#allocation2] sm:$0xff] %v157
      %174 = vst [vmem:[#allocation2 + $0x8] sm:$0xff] %v158
      %175 = vst [vmem:[#allocation2 + $0x10] sm:$0xff] %v159
      %176 = vst [vmem:[#allocation2 + $0x18] sm:$0xff] %v160
      %177 = vst [vmem:[#allocation2 + $0x20] sm:$0xff] %v161
      %178 = vst [vmem:[#allocation2 + $0x28] sm:$0xff] %v162
      %179 = vst [vmem:[#allocation2 + $0x30] sm:$0xff] %v163
      %180 = vst [vmem:[#allocation2 + $0x38] sm:$0xff] %v164
      %181 = vst [vmem:[#allocation2 + $0x40] sm:$0xff] %v165
      %182 = vst [vmem:[#allocation2 + $0x48] sm:$0xff] %v166
      %183 = vst [vmem:[#allocation2 + $0x50] sm:$0xff] %v167
      %184 = vst [vmem:[#allocation2 + $0x58] sm:$0xff] %v168
      %185 = vst [vmem:[#allocation2 + $0x60] sm:$0xff] %v169
      %186 = vst [vmem:[#allocation2 + $0x68] sm:$0xff] %v170
      %187 = vst [vmem:[#allocation2 + $0x70] sm:$0xff] %v171
      %188 = vst [vmem:[#allocation2 + $0x78] sm:$0xff] %v172
    $region25: #{tpu_custom_call.1} parent=1 // pred_fallthru
      _
    %v189 = vld [vmem:[#allocation4] sm:$0xff]
    %v190 = vld [vmem:[#allocation4 + $0x8] sm:$0xff]
    %v191 = vld [vmem:[#allocation4 + $0x10] sm:$0xff]
    %v192 = vld [vmem:[#allocation4 + $0x18] sm:$0xff]
    %v193 = vld [vmem:[#allocation4 + $0x20] sm:$0xff]
    %v194 = vld [vmem:[#allocation4 + $0x28] sm:$0xff]
    %v195 = vld [vmem:[#allocation4 + $0x30] sm:$0xff]
    %v196 = vld [vmem:[#allocation4 + $0x38] sm:$0xff]
    %v197 = vld [vmem:[#allocation4 + $0x40] sm:$0xff]
    %v198 = vld [vmem:[#allocation4 + $0x48] sm:$0xff]
    %v199 = vld [vmem:[#allocation4 + $0x50] sm:$0xff]
    %v200 = vld [vmem:[#allocation4 + $0x58] sm:$0xff]
    %v201 = vld [vmem:[#allocation4 + $0x60] sm:$0xff]
    %v202 = vld [vmem:[#allocation4 + $0x68] sm:$0xff]
    %v203 = vld [vmem:[#allocation4 + $0x70] sm:$0xff]
    %v204 = vld [vmem:[#allocation4 + $0x78] sm:$0xff]
    %v205 = vld [vmem:[#allocation4 + $0x80] sm:$0xff]
    %v206 = vld [vmem:[#allocation4 + $0x88] sm:$0xff]
    %v207 = vld [vmem:[#allocation4 + $0x90] sm:$0xff]
    %v208 = vld [vmem:[#allocation4 + $0x98] sm:$0xff]
    %v209 = vld [vmem:[#allocation4 + $0xa0] sm:$0xff]
    %v210 = vld [vmem:[#allocation4 + $0xa8] sm:$0xff]
    %v211 = vld [vmem:[#allocation4 + $0xb0] sm:$0xff]
    %v212 = vld [vmem:[#allocation4 + $0xb8] sm:$0xff]
    %v213 = vld [vmem:[#allocation4 + $0xc0] sm:$0xff]
    %v214 = vld [vmem:[#allocation4 + $0xc8] sm:$0xff]
    %v215 = vld [vmem:[#allocation4 + $0xd0] sm:$0xff]
    %v216 = vld [vmem:[#allocation4 + $0xd8] sm:$0xff]
    %v217 = vld [vmem:[#allocation4 + $0xe0] sm:$0xff]
    %v218 = vld [vmem:[#allocation4 + $0xe8] sm:$0xff]
    %v219 = vld [vmem:[#allocation4 + $0xf0] sm:$0xff]
    %v220 = vld [vmem:[#allocation4 + $0xf8] sm:$0xff]
    %v221 = vld [vmem:[#allocation6] sm:$0xff]
    %v222 = vld [vmem:[#allocation6 + $0x8] sm:$0xff]
    %v223 = vld [vmem:[#allocation6 + $0x10] sm:$0xff]
    %v224 = vld [vmem:[#allocation6 + $0x18] sm:$0xff]
    %v225 = vld [vmem:[#allocation6 + $0x20] sm:$0xff]
    %v226 = vld [vmem:[#allocation6 + $0x28] sm:$0xff]
    %v227 = vld [vmem:[#allocation6 + $0x30] sm:$0xff]
    %v228 = vld [vmem:[#allocation6 + $0x38] sm:$0xff]
    %v229 = vld [vmem:[#allocation6 + $0x40] sm:$0xff]
    %v230 = vld [vmem:[#allocation6 + $0x48] sm:$0xff]
    %v231 = vld [vmem:[#allocation6 + $0x50] sm:$0xff]
    %v232 = vld [vmem:[#allocation6 + $0x58] sm:$0xff]
    %v233 = vld [vmem:[#allocation6 + $0x60] sm:$0xff]
    %v234 = vld [vmem:[#allocation6 + $0x68] sm:$0xff]
    %v235 = vld [vmem:[#allocation6 + $0x70] sm:$0xff]
    %v236 = vld [vmem:[#allocation6 + $0x78] sm:$0xff]
    %v237 = vld [vmem:[#allocation6 + $0x80] sm:$0xff]
    %v238 = vld [vmem:[#allocation6 + $0x88] sm:$0xff]
    %v239 = vld [vmem:[#allocation6 + $0x90] sm:$0xff]
    %v240 = vld [vmem:[#allocation6 + $0x98] sm:$0xff]
    %v241 = vld [vmem:[#allocation6 + $0xa0] sm:$0xff]
    %v242 = vld [vmem:[#allocation6 + $0xa8] sm:$0xff]
    %v243 = vld [vmem:[#allocation6 + $0xb0] sm:$0xff]
    %v244 = vld [vmem:[#allocation6 + $0xb8] sm:$0xff]
    %v245 = vld [vmem:[#allocation6 + $0xc0] sm:$0xff]
    %v246 = vld [vmem:[#allocation6 + $0xc8] sm:$0xff]
    %v247 = vld [vmem:[#allocation6 + $0xd0] sm:$0xff]
    %v248 = vld [vmem:[#allocation6 + $0xd8] sm:$0xff]
    %v249 = vld [vmem:[#allocation6 + $0xe0] sm:$0xff]
    %v250 = vld [vmem:[#allocation6 + $0xe8] sm:$0xff]
    %v251 = vld [vmem:[#allocation6 + $0xf0] sm:$0xff]
    %v252 = vld [vmem:[#allocation6 + $0xf8] sm:$0xff]
    %v253 = vld [vmem:[#allocation2] sm:$0xff]
    %v254 = vld [vmem:[#allocation2 + $0x8] sm:$0xff]
    %v255 = vld [vmem:[#allocation2 + $0x10] sm:$0xff]
    %v256 = vld [vmem:[#allocation2 + $0x18] sm:$0xff]
    %v257 = vld [vmem:[#allocation2 + $0x20] sm:$0xff]
    %v258 = vld [vmem:[#allocation2 + $0x28] sm:$0xff]
    %v259 = vld [vmem:[#allocation2 + $0x30] sm:$0xff]
    %v260 = vld [vmem:[#allocation2 + $0x38] sm:$0xff]
    %v261 = vld [vmem:[#allocation2 + $0x40] sm:$0xff]
    %v262 = vld [vmem:[#allocation2 + $0x48] sm:$0xff]
    %v263 = vld [vmem:[#allocation2 + $0x50] sm:$0xff]
    %v264 = vld [vmem:[#allocation2 + $0x58] sm:$0xff]
    %v265 = vld [vmem:[#allocation2 + $0x60] sm:$0xff]
    %v266 = vld [vmem:[#allocation2 + $0x68] sm:$0xff]
    %v267 = vld [vmem:[#allocation2 + $0x70] sm:$0xff]
    %v268 = vld [vmem:[#allocation2 + $0x78] sm:$0xff]
    %269 = vmatpush.xpose.msra.mxu0 %v251
    %270 = vmatpush.xpose.msra.mxu0 %v249
    %271 = vmatpush.xpose.msra.mxu0 %v247
    %272 = vmatpush.xpose.msra.mxu0 %v245
    %273 = vmatpush.xpose.msra.mxu0 %v243
    %274 = vmatpush.xpose.msra.mxu0 %v241
    %275 = vmatpush.xpose.msra.mxu0 %v239
    %276 = vmatpush.xpose.msra.mxu0 %v237
    %277 = vmatpush.xpose.msra.mxu0 %v235
    %278 = vmatpush.xpose.msra.mxu0 %v233
    %279 = vmatpush.xpose.msra.mxu0 %v231
    %280 = vmatpush.xpose.msra.mxu0 %v229
    %281 = vmatpush.xpose.msra.mxu0 %v227
    %282 = vmatpush.xpose.msra.mxu0 %v225
    %283 = vmatpush.xpose.msra.mxu0 %v223
    %284 = vmatpush.xpose.msra.mxu0 %v221
    %285 = vmatmul.f32.gmra.mxu0 %v189
    %v286 = vpop.f32.mrf.mxu0
    %v287 = vadd.f32 0.0, %v286
    %288 = vmatmul.f32.gmra.mxu0 %v191
    %v289 = vpop.f32.mrf.mxu0
    %v290 = vadd.f32 0.0, %v289
    %291 = vmatmul.f32.gmra.mxu0 %v193
    %v292 = vpop.f32.mrf.mxu0
    %v293 = vadd.f32 0.0, %v292
    %294 = vmatmul.f32.gmra.mxu0 %v195
    %v295 = vpop.f32.mrf.mxu0
    %v296 = vadd.f32 0.0, %v295
    %297 = vmatmul.f32.gmra.mxu0 %v197
    %v298 = vpop.f32.mrf.mxu0
    %v299 = vadd.f32 0.0, %v298
    %300 = vmatmul.f32.gmra.mxu0 %v199
    %v301 = vpop.f32.mrf.mxu0
    %v302 = vadd.f32 0.0, %v301
    %303 = vmatmul.f32.gmra.mxu0 %v201
    %v304 = vpop.f32.mrf.mxu0
    %v305 = vadd.f32 0.0, %v304
    %306 = vmatmul.f32.gmra.mxu0 %v203
    %v307 = vpop.f32.mrf.mxu0
    %v308 = vadd.f32 0.0, %v307
    %309 = vmatmul.f32.gmra.mxu0 %v205
    %v310 = vpop.f32.mrf.mxu0
    %v311 = vadd.f32 0.0, %v310
    %312 = vmatmul.f32.gmra.mxu0 %v207
    %v313 = vpop.f32.mrf.mxu0
    %v314 = vadd.f32 0.0, %v313
    %315 = vmatmul.f32.gmra.mxu0 %v209
    %v316 = vpop.f32.mrf.mxu0
    %v317 = vadd.f32 0.0, %v316
    %318 = vmatmul.f32.gmra.mxu0 %v211
    %v319 = vpop.f32.mrf.mxu0
    %v320 = vadd.f32 0.0, %v319
    %321 = vmatmul.f32.gmra.mxu0 %v213
    %v322 = vpop.f32.mrf.mxu0
    %v323 = vadd.f32 0.0, %v322
    %324 = vmatmul.f32.gmra.mxu0 %v215
    %v325 = vpop.f32.mrf.mxu0
    %v326 = vadd.f32 0.0, %v325
    %327 = vmatmul.f32.gmra.mxu0 %v217
    %v328 = vpop.f32.mrf.mxu0
    %v329 = vadd.f32 0.0, %v328
    %330 = vmatmul.f32.gmra.mxu0 %v219
    %v331 = vpop.f32.mrf.mxu0
    %v332 = vadd.f32 0.0, %v331
    %333 = vdwg.mxu0
    %334 = vmatpush.xpose.msra.mxu0 %v252
    %335 = vmatpush.xpose.msra.mxu0 %v250
    %336 = vmatpush.xpose.msra.mxu0 %v248
    %337 = vmatpush.xpose.msra.mxu0 %v246
    %338 = vmatpush.xpose.msra.mxu0 %v244
    %339 = vmatpush.xpose.msra.mxu0 %v242
    %340 = vmatpush.xpose.msra.mxu0 %v240
    %341 = vmatpush.xpose.msra.mxu0 %v238
    %342 = vmatpush.xpose.msra.mxu0 %v236
    %343 = vmatpush.xpose.msra.mxu0 %v234
    %344 = vmatpush.xpose.msra.mxu0 %v232
    %345 = vmatpush.xpose.msra.mxu0 %v230
    %346 = vmatpush.xpose.msra.mxu0 %v228
    %347 = vmatpush.xpose.msra.mxu0 %v226
    %348 = vmatpush.xpose.msra.mxu0 %v224
    %349 = vmatpush.xpose.msra.mxu0 %v222
    %350 = vmatmul.f32.gmra.mxu0 %v190
    %v351 = vpop.f32.mrf.mxu0
    %v352 = vadd.f32 %v287, %v351
    %353 = vmatmul.f32.gmra.mxu0 %v192
    %v354 = vpop.f32.mrf.mxu0
    %v355 = vadd.f32 %v290, %v354
    %356 = vmatmul.f32.gmra.mxu0 %v194
    %v357 = vpop.f32.mrf.mxu0
    %v358 = vadd.f32 %v293, %v357
    %359 = vmatmul.f32.gmra.mxu0 %v196
    %v360 = vpop.f32.mrf.mxu0
    %v361 = vadd.f32 %v296, %v360
    %362 = vmatmul.f32.gmra.mxu0 %v198
    %v363 = vpop.f32.mrf.mxu0
    %v364 = vadd.f32 %v299, %v363
    %365 = vmatmul.f32.gmra.mxu0 %v200
    %v366 = vpop.f32.mrf.mxu0
    %v367 = vadd.f32 %v302, %v366
    %368 = vmatmul.f32.gmra.mxu0 %v202
    %v369 = vpop.f32.mrf.mxu0
    %v370 = vadd.f32 %v305, %v369
    %371 = vmatmul.f32.gmra.mxu0 %v204
    %v372 = vpop.f32.mrf.mxu0
    %v373 = vadd.f32 %v308, %v372
    %374 = vmatmul.f32.gmra.mxu0 %v206
    %v375 = vpop.f32.mrf.mxu0
    %v376 = vadd.f32 %v311, %v375
    %377 = vmatmul.f32.gmra.mxu0 %v208
    %v378 = vpop.f32.mrf.mxu0
    %v379 = vadd.f32 %v314, %v378
    %380 = vmatmul.f32.gmra.mxu0 %v210
    %v381 = vpop.f32.mrf.mxu0
    %v382 = vadd.f32 %v317, %v381
    %383 = vmatmul.f32.gmra.mxu0 %v212
    %v384 = vpop.f32.mrf.mxu0
    %v385 = vadd.f32 %v320, %v384
    %386 = vmatmul.f32.gmra.mxu0 %v214
    %v387 = vpop.f32.mrf.mxu0
    %v388 = vadd.f32 %v323, %v387
    %389 = vmatmul.f32.gmra.mxu0 %v216
    %v390 = vpop.f32.mrf.mxu0
    %v391 = vadd.f32 %v326, %v390
    %392 = vmatmul.f32.gmra.mxu0 %v218
    %v393 = vpop.f32.mrf.mxu0
    %v394 = vadd.f32 %v329, %v393
    %395 = vmatmul.f32.gmra.mxu0 %v220
    %v396 = vpop.f32.mrf.mxu0
    %v397 = vadd.f32 %v332, %v396
    %398 = vdwg.mxu0
    %v399 = vadd.f32 %v253, %v352
    %v400 = vadd.f32 %v254, %v355
    %v401 = vadd.f32 %v255, %v358
    %v402 = vadd.f32 %v256, %v361
    %v403 = vadd.f32 %v257, %v364
    %v404 = vadd.f32 %v258, %v367
    %v405 = vadd.f32 %v259, %v370
    %v406 = vadd.f32 %v260, %v373
    %v407 = vadd.f32 %v261, %v376
    %v408 = vadd.f32 %v262, %v379
    %v409 = vadd.f32 %v263, %v382
    %v410 = vadd.f32 %v264, %v385
    %v411 = vadd.f32 %v265, %v388
    %v412 = vadd.f32 %v266, %v391
    %v413 = vadd.f32 %v267, %v394
    %v414 = vadd.f32 %v268, %v397
    %415 = vst [vmem:[#allocation2] sm:$0xff] %v399
    %416 = vst [vmem:[#allocation2 + $0x8] sm:$0xff] %v400
    %417 = vst [vmem:[#allocation2 + $0x10] sm:$0xff] %v401
    %418 = vst [vmem:[#allocation2 + $0x18] sm:$0xff] %v402
    %419 = vst [vmem:[#allocation2 + $0x20] sm:$0xff] %v403
    %420 = vst [vmem:[#allocation2 + $0x28] sm:$0xff] %v404
    %421 = vst [vmem:[#allocation2 + $0x30] sm:$0xff] %v405
    %422 = vst [vmem:[#allocation2 + $0x38] sm:$0xff] %v406
    %423 = vst [vmem:[#allocation2 + $0x40] sm:$0xff] %v407
    %424 = vst [vmem:[#allocation2 + $0x48] sm:$0xff] %v408
    %425 = vst [vmem:[#allocation2 + $0x50] sm:$0xff] %v409
    %426 = vst [vmem:[#allocation2 + $0x58] sm:$0xff] %v410
    %427 = vst [vmem:[#allocation2 + $0x60] sm:$0xff] %v411
    %428 = vst [vmem:[#allocation2 + $0x68] sm:$0xff] %v412
    %429 = vst [vmem:[#allocation2 + $0x70] sm:$0xff] %v413
    %430 = vst [vmem:[#allocation2 + $0x78] sm:$0xff] %v414
    // Predicated region
    $region26: #{tpu_custom_call.1} parent=1 // pred_check
      %p431 = pneg %p44
    $region27: #{tpu_custom_call.1} parent=1 // pred_check_branch
      %433 = sbr.rel (%p431) target = $region29
    $region28: #{tpu_custom_call.1} parent=1 // pred_region
      %v434 = vld [vmem:[#allocation2] sm:$0xff]
      %v435 = vld [vmem:[#allocation2 + $0x8] sm:$0xff]
      %v436 = vld [vmem:[#allocation2 + $0x10] sm:$0xff]
      %v437 = vld [vmem:[#allocation2 + $0x18] sm:$0xff]
      %v438 = vld [vmem:[#allocation2 + $0x20] sm:$0xff]
      %v439 = vld [vmem:[#allocation2 + $0x28] sm:$0xff]
      %v440 = vld [vmem:[#allocation2 + $0x30] sm:$0xff]
      %v441 = vld [vmem:[#allocation2 + $0x38] sm:$0xff]
      %v442 = vld [vmem:[#allocation2 + $0x40] sm:$0xff]
      %v443 = vld [vmem:[#allocation2 + $0x48] sm:$0xff]
      %v444 = vld [vmem:[#allocation2 + $0x50] sm:$0xff]
      %v445 = vld [vmem:[#allocation2 + $0x58] sm:$0xff]
      %v446 = vld [vmem:[#allocation2 + $0x60] sm:$0xff]
      %v447 = vld [vmem:[#allocation2 + $0x68] sm:$0xff]
      %v448 = vld [vmem:[#allocation2 + $0x70] sm:$0xff]
      %v449 = vld [vmem:[#allocation2 + $0x78] sm:$0xff]
      %v450 = vld [vmem:[#allocation3] sm:$0xff]
      %v451 = vld [vmem:[#allocation3 + $0x8] sm:$0xff]
      %v452 = vld [vmem:[#allocation3 + $0x10] sm:$0xff]
      %v453 = vld [vmem:[#allocation3 + $0x18] sm:$0xff]
      %v454 = vld [vmem:[#allocation3 + $0x20] sm:$0xff]
      %v455 = vld [vmem:[#allocation3 + $0x28] sm:$0xff]
      %v456 = vld [vmem:[#allocation3 + $0x30] sm:$0xff]
      %v457 = vld [vmem:[#allocation3 + $0x38] sm:$0xff]
      %v458 = vld [vmem:[#allocation3 + $0x40] sm:$0xff]
      %v459 = vld [vmem:[#allocation3 + $0x48] sm:$0xff]
      %v460 = vld [vmem:[#allocation3 + $0x50] sm:$0xff]
      %v461 = vld [vmem:[#allocation3 + $0x58] sm:$0xff]
      %v462 = vld [vmem:[#allocation3 + $0x60] sm:$0xff]
      %v463 = vld [vmem:[#allocation3 + $0x68] sm:$0xff]
      %v464 = vld [vmem:[#allocation3 + $0x70] sm:$0xff]
      %v465 = vld [vmem:[#allocation3 + $0x78] sm:$0xff]
      %v466 = vmul.f32 %v434, %v434
      %v467 = vmul.f32 %v435, %v435
      %v468 = vmul.f32 %v436, %v436
      %v469 = vmul.f32 %v437, %v437
      %v470 = vmul.f32 %v438, %v438
      %v471 = vmul.f32 %v439, %v439
      %v472 = vmul.f32 %v440, %v440
      %v473 = vmul.f32 %v441, %v441
      %v474 = vmul.f32 %v442, %v442
      %v475 = vmul.f32 %v443, %v443
      %v476 = vmul.f32 %v444, %v444
      %v477 = vmul.f32 %v445, %v445
      %v478 = vmul.f32 %v446, %v446
      %v479 = vmul.f32 %v447, %v447
      %v480 = vmul.f32 %v448, %v448
      %v481 = vmul.f32 %v449, %v449
      %482 = vadd.xlane.f32.xlu0 %v466
      %v483 = vpop.xlane.xlu0 %482
      %484 = vadd.xlane.f32.xlu0 %v467
      %v485 = vpop.xlane.xlu0 %484
      %486 = vadd.xlane.f32.xlu0 %v468
      %v487 = vpop.xlane.xlu0 %486
      %488 = vadd.xlane.f32.xlu0 %v469
      %v489 = vpop.xlane.xlu0 %488
      %490 = vadd.xlane.f32.xlu0 %v470
      %v491 = vpop.xlane.xlu0 %490
      %492 = vadd.xlane.f32.xlu0 %v471
      %v493 = vpop.xlane.xlu0 %492
      %494 = vadd.xlane.f32.xlu0 %v472
      %v495 = vpop.xlane.xlu0 %494
      %496 = vadd.xlane.f32.xlu0 %v473
      %v497 = vpop.xlane.xlu0 %496
      %498 = vadd.xlane.f32.xlu0 %v474
      %v499 = vpop.xlane.xlu0 %498
      %500 = vadd.xlane.f32.xlu0 %v475
      %v501 = vpop.xlane.xlu0 %500
      %502 = vadd.xlane.f32.xlu0 %v476
      %v503 = vpop.xlane.xlu0 %502
      %504 = vadd.xlane.f32.xlu0 %v477
      %v505 = vpop.xlane.xlu0 %504
      %506 = vadd.xlane.f32.xlu0 %v478
      %v507 = vpop.xlane.xlu0 %506
      %508 = vadd.xlane.f32.xlu0 %v479
      %v509 = vpop.xlane.xlu0 %508
      %510 = vadd.xlane.f32.xlu0 %v480
      %v511 = vpop.xlane.xlu0 %510
      %512 = vadd.xlane.f32.xlu0 %v481
      %v513 = vpop.xlane.xlu0 %512
      %v514 = vadd.f32 %v450, %v483
      %v515 = vadd.f32 %v451, %v485
      %v516 = vadd.f32 %v452, %v487
      %v517 = vadd.f32 %v453, %v489
      %v518 = vadd.f32 %v454, %v491
      %v519 = vadd.f32 %v455, %v493
      %v520 = vadd.f32 %v456, %v495
      %v521 = vadd.f32 %v457, %v497
      %v522 = vadd.f32 %v458, %v499
      %v523 = vadd.f32 %v459, %v501
      %v524 = vadd.f32 %v460, %v503
      %v525 = vadd.f32 %v461, %v505
      %v526 = vadd.f32 %v462, %v507
      %v527 = vadd.f32 %v463, %v509
      %v528 = vadd.f32 %v464, %v511
      %v529 = vadd.f32 %v465, %v513
      %vm530 = vcmask 7168
      %531 = vst.msk [vmem:[#allocation3] sm:$0xff] %vm530, %v514
      %532 = vst.msk [vmem:[#allocation3 + $0x8] sm:$0xff] %vm530, %v515
      %533 = vst.msk [vmem:[#allocation3 + $0x10] sm:$0xff] %vm530, %v516
      %534 = vst.msk [vmem:[#allocation3 + $0x18] sm:$0xff] %vm530, %v517
      %535 = vst.msk [vmem:[#allocation3 + $0x20] sm:$0xff] %vm530, %v518
      %536 = vst.msk [vmem:[#allocation3 + $0x28] sm:$0xff] %vm530, %v519
      %537 = vst.msk [vmem:[#allocation3 + $0x30] sm:$0xff] %vm530, %v520
      %538 = vst.msk [vmem:[#allocation3 + $0x38] sm:$0xff] %vm530, %v521
      %539 = vst.msk [vmem:[#allocation3 + $0x40] sm:$0xff] %vm530, %v522
      %540 = vst.msk [vmem:[#allocation3 + $0x48] sm:$0xff] %vm530, %v523
      %541 = vst.msk [vmem:[#allocation3 + $0x50] sm:$0xff] %vm530, %v524
      %542 = vst.msk [vmem:[#allocation3 + $0x58] sm:$0xff] %vm530, %v525
      %543 = vst.msk [vmem:[#allocation3 + $0x60] sm:$0xff] %vm530, %v526
      %544 = vst.msk [vmem:[#allocation3 + $0x68] sm:$0xff] %vm530, %v527
      %545 = vst.msk [vmem:[#allocation3 + $0x70] sm:$0xff] %vm530, %v528
      %546 = vst.msk [vmem:[#allocation3 + $0x78] sm:$0xff] %vm530, %v529
    $region29: #{tpu_custom_call.1} parent=1 // pred_fallthru
      _
    // Predicated region
    $region30: #{tpu_custom_call.1} parent=1 // pred_check
      _
    $region31: #{tpu_custom_call.1} parent=1 // pred_check_branch
      %548 = sbr.rel (%p45) target = $region33
    $region32: #{tpu_custom_call.1} parent=1 // pred_region
      %v549 = vld [vmem:[#allocation3] sm:$0xff]
      %v550 = vld [vmem:[#allocation3 + $0x8] sm:$0xff]
      %v551 = vld [vmem:[#allocation3 + $0x10] sm:$0xff]
      %v552 = vld [vmem:[#allocation3 + $0x18] sm:$0xff]
      %v553 = vld [vmem:[#allocation3 + $0x20] sm:$0xff]
      %v554 = vld [vmem:[#allocation3 + $0x28] sm:$0xff]
      %v555 = vld [vmem:[#allocation3 + $0x30] sm:$0xff]
      %v556 = vld [vmem:[#allocation3 + $0x38] sm:$0xff]
      %v557 = vld [vmem:[#allocation3 + $0x40] sm:$0xff]
      %v558 = vld [vmem:[#allocation3 + $0x48] sm:$0xff]
      %v559 = vld [vmem:[#allocation3 + $0x50] sm:$0xff]
      %v560 = vld [vmem:[#allocation3 + $0x58] sm:$0xff]
      %v561 = vld [vmem:[#allocation3 + $0x60] sm:$0xff]
      %v562 = vld [vmem:[#allocation3 + $0x68] sm:$0xff]
      %v563 = vld [vmem:[#allocation3 + $0x70] sm:$0xff]
      %v564 = vld [vmem:[#allocation3 + $0x78] sm:$0xff]
      %v565 = vrsqrt.pop %v549
      %v566 = vmul.f32 %v565, %v549
      %v567 = vmul.f32 %v566, %v565
      %v568 = vmul.f32 0.5, %v567
      %v569 = vsub.f32 1.5, %v568
      %v570 = vmul.f32 %v565, %v569
      %v571 = vmul.f32 %v549, %v570
      %vm572 = vcmp.eq.f32.partialorder %v549, inf
      %v573 = vsel %vm572, %v549, %v571
      %vm574 = vcmp.eq.f32.partialorder %v549, 0.0
      %v575 = vand.u32 %v549, 2147483648
      %v576 = vsel %vm574, %v575, %v573
      %v577 = vrsqrt.pop %v550
      %v578 = vmul.f32 %v577, %v550
      %v579 = vmul.f32 %v578, %v577
      %v580 = vmul.f32 0.5, %v579
      %v581 = vsub.f32 1.5, %v580
      %v582 = vmul.f32 %v577, %v581
      %v583 = vmul.f32 %v550, %v582
      %vm584 = vcmp.eq.f32.partialorder %v550, inf
      %v585 = vsel %vm584, %v550, %v583
      %vm586 = vcmp.eq.f32.partialorder %v550, 0.0
      %v587 = vand.u32 %v550, 2147483648
      %v588 = vsel %vm586, %v587, %v585
      %v589 = vrsqrt.pop %v551
      %v590 = vmul.f32 %v589, %v551
      %v591 = vmul.f32 %v590, %v589
      %v592 = vmul.f32 0.5, %v591
      %v593 = vsub.f32 1.5, %v592
      %v594 = vmul.f32 %v589, %v593
      %v595 = vmul.f32 %v551, %v594
      %vm596 = vcmp.eq.f32.partialorder %v551, inf
      %v597 = vsel %vm596, %v551, %v595
      %vm598 = vcmp.eq.f32.partialorder %v551, 0.0
      %v599 = vand.u32 %v551, 2147483648
      %v600 = vsel %vm598, %v599, %v597
      %v601 = vrsqrt.pop %v552
      %v602 = vmul.f32 %v601, %v552
      %v603 = vmul.f32 %v602, %v601
      %v604 = vmul.f32 0.5, %v603
      %v605 = vsub.f32 1.5, %v604
      %v606 = vmul.f32 %v601, %v605
      %v607 = vmul.f32 %v552, %v606
      %vm608 = vcmp.eq.f32.partialorder %v552, inf
      %v609 = vsel %vm608, %v552, %v607
      %vm610 = vcmp.eq.f32.partialorder %v552, 0.0
      %v611 = vand.u32 %v552, 2147483648
      %v612 = vsel %vm610, %v611, %v609
      %v613 = vrsqrt.pop %v553
      %v614 = vmul.f32 %v613, %v553
      %v615 = vmul.f32 %v614, %v613
      %v616 = vmul.f32 0.5, %v615
      %v617 = vsub.f32 1.5, %v616
      %v618 = vmul.f32 %v613, %v617
      %v619 = vmul.f32 %v553, %v618
      %vm620 = vcmp.eq.f32.partialorder %v553, inf
      %v621 = vsel %vm620, %v553, %v619
      %vm622 = vcmp.eq.f32.partialorder %v553, 0.0
      %v623 = vand.u32 %v553, 2147483648
      %v624 = vsel %vm622, %v623, %v621
      %v625 = vrsqrt.pop %v554
      %v626 = vmul.f32 %v625, %v554
      %v627 = vmul.f32 %v626, %v625
      %v628 = vmul.f32 0.5, %v627
      %v629 = vsub.f32 1.5, %v628
      %v630 = vmul.f32 %v625, %v629
      %v631 = vmul.f32 %v554, %v630
      %vm632 = vcmp.eq.f32.partialorder %v554, inf
      %v633 = vsel %vm632, %v554, %v631
      %vm634 = vcmp.eq.f32.partialorder %v554, 0.0
      %v635 = vand.u32 %v554, 2147483648
      %v636 = vsel %vm634, %v635, %v633
      %v637 = vrsqrt.pop %v555
      %v638 = vmul.f32 %v637, %v555
      %v639 = vmul.f32 %v638, %v637
      %v640 = vmul.f32 0.5, %v639
      %v641 = vsub.f32 1.5, %v640
      %v642 = vmul.f32 %v637, %v641
      %v643 = vmul.f32 %v555, %v642
      %vm644 = vcmp.eq.f32.partialorder %v555, inf
      %v645 = vsel %vm644, %v555, %v643
      %vm646 = vcmp.eq.f32.partialorder %v555, 0.0
      %v647 = vand.u32 %v555, 2147483648
      %v648 = vsel %vm646, %v647, %v645
      %v649 = vrsqrt.pop %v556
      %v650 = vmul.f32 %v649, %v556
      %v651 = vmul.f32 %v650, %v649
      %v652 = vmul.f32 0.5, %v651
      %v653 = vsub.f32 1.5, %v652
      %v654 = vmul.f32 %v649, %v653
      %v655 = vmul.f32 %v556, %v654
      %vm656 = vcmp.eq.f32.partialorder %v556, inf
      %v657 = vsel %vm656, %v556, %v655
      %vm658 = vcmp.eq.f32.partialorder %v556, 0.0
      %v659 = vand.u32 %v556, 2147483648
      %v660 = vsel %vm658, %v659, %v657
      %v661 = vrsqrt.pop %v557
      %v662 = vmul.f32 %v661, %v557
      %v663 = vmul.f32 %v662, %v661
      %v664 = vmul.f32 0.5, %v663
      %v665 = vsub.f32 1.5, %v664
      %v666 = vmul.f32 %v661, %v665
      %v667 = vmul.f32 %v557, %v666
      %vm668 = vcmp.eq.f32.partialorder %v557, inf
      %v669 = vsel %vm668, %v557, %v667
      %vm670 = vcmp.eq.f32.partialorder %v557, 0.0
      %v671 = vand.u32 %v557, 2147483648
      %v672 = vsel %vm670, %v671, %v669
      %v673 = vrsqrt.pop %v558
      %v674 = vmul.f32 %v673, %v558
      %v675 = vmul.f32 %v674, %v673
      %v676 = vmul.f32 0.5, %v675
      %v677 = vsub.f32 1.5, %v676
      %v678 = vmul.f32 %v673, %v677
      %v679 = vmul.f32 %v558, %v678
      %vm680 = vcmp.eq.f32.partialorder %v558, inf
      %v681 = vsel %vm680, %v558, %v679
      %vm682 = vcmp.eq.f32.partialorder %v558, 0.0
      %v683 = vand.u32 %v558, 2147483648
      %v684 = vsel %vm682, %v683, %v681
      %v685 = vrsqrt.pop %v559
      %v686 = vmul.f32 %v685, %v559
      %v687 = vmul.f32 %v686, %v685
      %v688 = vmul.f32 0.5, %v687
      %v689 = vsub.f32 1.5, %v688
      %v690 = vmul.f32 %v685, %v689
      %v691 = vmul.f32 %v559, %v690
      %vm692 = vcmp.eq.f32.partialorder %v559, inf
      %v693 = vsel %vm692, %v559, %v691
      %vm694 = vcmp.eq.f32.partialorder %v559, 0.0
      %v695 = vand.u32 %v559, 2147483648
      %v696 = vsel %vm694, %v695, %v693
      %v697 = vrsqrt.pop %v560
      %v698 = vmul.f32 %v697, %v560
      %v699 = vmul.f32 %v698, %v697
      %v700 = vmul.f32 0.5, %v699
      %v701 = vsub.f32 1.5, %v700
      %v702 = vmul.f32 %v697, %v701
      %v703 = vmul.f32 %v560, %v702
      %vm704 = vcmp.eq.f32.partialorder %v560, inf
      %v705 = vsel %vm704, %v560, %v703
      %vm706 = vcmp.eq.f32.partialorder %v560, 0.0
      %v707 = vand.u32 %v560, 2147483648
      %v708 = vsel %vm706, %v707, %v705
      %v709 = vrsqrt.pop %v561
      %v710 = vmul.f32 %v709, %v561
      %v711 = vmul.f32 %v710, %v709
      %v712 = vmul.f32 0.5, %v711
      %v713 = vsub.f32 1.5, %v712
      %v714 = vmul.f32 %v709, %v713
      %v715 = vmul.f32 %v561, %v714
      %vm716 = vcmp.eq.f32.partialorder %v561, inf
      %v717 = vsel %vm716, %v561, %v715
      %vm718 = vcmp.eq.f32.partialorder %v561, 0.0
      %v719 = vand.u32 %v561, 2147483648
      %v720 = vsel %vm718, %v719, %v717
      %v721 = vrsqrt.pop %v562
      %v722 = vmul.f32 %v721, %v562
      %v723 = vmul.f32 %v722, %v721
      %v724 = vmul.f32 0.5, %v723
      %v725 = vsub.f32 1.5, %v724
      %v726 = vmul.f32 %v721, %v725
      %v727 = vmul.f32 %v562, %v726
      %vm728 = vcmp.eq.f32.partialorder %v562, inf
      %v729 = vsel %vm728, %v562, %v727
      %vm730 = vcmp.eq.f32.partialorder %v562, 0.0
      %v731 = vand.u32 %v562, 2147483648
      %v732 = vsel %vm730, %v731, %v729
      %v733 = vrsqrt.pop %v563
      %v734 = vmul.f32 %v733, %v563
      %v735 = vmul.f32 %v734, %v733
      %v736 = vmul.f32 0.5, %v735
      %v737 = vsub.f32 1.5, %v736
      %v738 = vmul.f32 %v733, %v737
      %v739 = vmul.f32 %v563, %v738
      %vm740 = vcmp.eq.f32.partialorder %v563, inf
      %v741 = vsel %vm740, %v563, %v739
      %vm742 = vcmp.eq.f32.partialorder %v563, 0.0
      %v743 = vand.u32 %v563, 2147483648
      %v744 = vsel %vm742, %v743, %v741
      %v745 = vrsqrt.pop %v564
      %v746 = vmul.f32 %v745, %v564
      %v747 = vmul.f32 %v746, %v745
      %v748 = vmul.f32 0.5, %v747
      %v749 = vsub.f32 1.5, %v748
      %v750 = vmul.f32 %v745, %v749
      %v751 = vmul.f32 %v564, %v750
      %vm752 = vcmp.eq.f32.partialorder %v564, inf
      %v753 = vsel %vm752, %v564, %v751
      %vm754 = vcmp.eq.f32.partialorder %v564, 0.0
      %v755 = vand.u32 %v564, 2147483648
      %v756 = vsel %vm754, %v755, %v753
      %vm757 = vcmask 7168
      %758 = vst.msk [vmem:[%s2] sm:$0xff] %vm757, %v576
      %759 = vst.msk [vmem:[%s2 + $0x8] sm:$0xff] %vm757, %v588
      %760 = vst.msk [vmem:[%s2 + $0x10] sm:$0xff] %vm757, %v600
      %761 = vst.msk [vmem:[%s2 + $0x18] sm:$0xff] %vm757, %v612
      %762 = vst.msk [vmem:[%s2 + $0x20] sm:$0xff] %vm757, %v624
      %763 = vst.msk [vmem:[%s2 + $0x28] sm:$0xff] %vm757, %v636
      %764 = vst.msk [vmem:[%s2 + $0x30] sm:$0xff] %vm757, %v648
      %765 = vst.msk [vmem:[%s2 + $0x38] sm:$0xff] %vm757, %v660
      %766 = vst.msk [vmem:[%s2 + $0x40] sm:$0xff] %vm757, %v672
      %767 = vst.msk [vmem:[%s2 + $0x48] sm:$0xff] %vm757, %v684
      %768 = vst.msk [vmem:[%s2 + $0x50] sm:$0xff] %vm757, %v696
      %769 = vst.msk [vmem:[%s2 + $0x58] sm:$0xff] %vm757, %v708
      %770 = vst.msk [vmem:[%s2 + $0x60] sm:$0xff] %vm757, %v720
      %771 = vst.msk [vmem:[%s2 + $0x68] sm:$0xff] %vm757, %v732
      %772 = vst.msk [vmem:[%s2 + $0x70] sm:$0xff] %vm757, %v744
      %773 = vst.msk [vmem:[%s2 + $0x78] sm:$0xff] %vm757, %v756
    $region33: #{tpu_custom_call.1} parent=1 // pred_fallthru
      _
    // Predicated region
    $region34: #{tpu_custom_call.1} parent=1 // pred_check
      _
    $region35: #{tpu_custom_call.1} parent=1 // pred_check_branch
      %775 = sbr.rel (0) target = $region37
    $region36: #{tpu_custom_call.1} parent=1 // pred_region
      _
    $region37: #{tpu_custom_call.1} parent=1 // pred_fallthru
      _
    // Predicated region
    $region38: #{tpu_custom_call.1} parent=1 // pred_check
      _
    $region39: #{tpu_custom_call.1} parent=1 // pred_check_branch
      %777 = sbr.rel (0) target = $region41
    $region40: #{tpu_custom_call.1} parent=1 // pred_region
      _
    $region41: #{tpu_custom_call.1} parent=1 // pred_fallthru
      _
    %778 = vsyncpa [#allocation5], 1
    %779 = vsyncpa [#allocation7], 1

</llo_original>
